<compile_context>
chip_gen: v5e
topology: v5e:2x2
jax: 0.10.0
libtpu: 0.0.40
codegen_flags: <defaults>
</compile_context>

<pallas_src>
from functools import partial

import numpy as np
import jax
import jax.numpy as jnp
from jax.experimental import pallas as pl
from jax.experimental.pallas import tpu as pltpu


# ----------------------------- parameter setup ------------------------------
def _round_up(x, m):
    return (x + m - 1) // m * m


def create_dft_kernels(n_fft, freq_bins=None, fmin=50, fmax=6000, sr=44100):
    if freq_bins is None:
        freq_bins = (n_fft - 1) // 2 + 1
    s = np.arange(n_fft)
    wsin = np.zeros((freq_bins, n_fft))
    wcos = np.zeros((freq_bins, n_fft))
    start_bin = fmin * n_fft / sr
    scaling_ind = (fmax - fmin) * (n_fft / sr) / freq_bins
    for k in range(freq_bins):
        freq = (k * scaling_ind + start_bin) * sr / n_fft
        wsin[k, :] = np.sin(2 * np.pi * freq * s / sr)
        wcos[k, :] = np.cos(2 * np.pi * freq * s / sr)
    return wsin.astype(np.float32), wcos.astype(np.float32)


def broadcast_dim(x):
    """Mirror of the PyTorch broadcast_dim helper."""
    if x.ndim == 2:
        x = x[:, None, :]
    elif x.ndim == 1:
        x = x[None, :]
    elif x.ndim == 3:
        pass
    else:
        raise ValueError("Only support input with shape = (batch, len) or shape = (len)")
    return x


# ------------------------------- Pallas kernel -------------------------------
def _make_dft_kernel(fmt, trainable):
    """Build a kernel with the output-format epilogue fused into the store.

    w_ref[0] holds -wsin^T (so the dot yields -spec_imag directly),
    w_ref[1] holds  wcos^T.
    """
    if fmt == "Complex":
        def kernel(x_ref, w_ref, nimag_ref, real_ref):
            x = x_ref[...]
            nimag_ref[...] = jnp.dot(x, w_ref[0], preferred_element_type=jnp.float32)
            real_ref[...] = jnp.dot(x, w_ref[1], preferred_element_type=jnp.float32)
        return kernel, 2

    if fmt == "Magnitude":
        def kernel(x_ref, w_ref, out_ref):
            x = x_ref[...]
            nimag = jnp.dot(x, w_ref[0], preferred_element_type=jnp.float32)
            real = jnp.dot(x, w_ref[1], preferred_element_type=jnp.float32)
            spec = real * real + nimag * nimag        # sign of imag irrelevant
            if trainable:
                spec = spec + 1e-8
            out_ref[...] = jnp.sqrt(spec)             # EUP slot — essentially free
        return kernel, 1

    if fmt == "Phase":
        def kernel(x_ref, w_ref, out_ref):
            x = x_ref[...]
            nimag = jnp.dot(x, w_ref[0], preferred_element_type=jnp.float32)
            real = jnp.dot(x, w_ref[1], preferred_element_type=jnp.float32)
            out_ref[...] = jnp.arctan2(nimag + 0.0, real)
        return kernel, 1

    raise ValueError(f"unknown output_format {fmt}")


@partial(jax.jit, static_argnames=("fmt", "trainable", "tm", "tf"))
def dft_pallas(x2d, w_stacked, *, fmt, trainable, tm, tf):
    """x2d: (M, n_fft) f32; w_stacked: (2, n_fft, F_pad) f32, F_pad % tf == 0.

    Returns tuple of (M, F_pad) float32 arrays (2 for Complex, 1 otherwise),
    already trimmed back to the original M.
    """
    M, L = x2d.shape
    F_pad = w_stacked.shape[2]
    assert F_pad % tf == 0

    M_pad = _round_up(M, tm)
    if M_pad != M:
        x2d = jnp.pad(x2d, ((0, M_pad - M), (0, 0)))

    kernel, n_out = _make_dft_kernel(fmt, trainable)

    out_shape = tuple(jax.ShapeDtypeStruct((M_pad, F_pad), jnp.float32)
                      for _ in range(n_out))
    out_specs = tuple(pl.BlockSpec((tm, tf), lambda m, f: (m, f))
                      for _ in range(n_out))

    outs = pl.pallas_call(
        kernel,
        out_shape=out_shape,
        grid_spec=pltpu.PrefetchScalarGridSpec(
            num_scalar_prefetch=0,
            # m outer / f inner: the x tile (index_map depends only on m) stays
            # resident in VMEM across the entire frequency sweep.
            grid=(M_pad // tm, F_pad // tf),
            in_specs=[
                pl.BlockSpec((tm, L), lambda m, f: (m, 0)),        # x tile
                pl.BlockSpec((2, L, tf), lambda m, f: (0, 0, f)),  # (-sin, cos) tile
            ],
            out_specs=out_specs,
        ),
        compiler_params=pltpu.CompilerParams(
            dimension_semantics=("parallel", "parallel"),
            vmem_limit_bytes=48 * 1024 * 1024,
        ),
    )(x2d, w_stacked)

    if not isinstance(outs, (tuple, list)):
        outs = (outs,)
    return tuple(o[:M] for o in outs)


# ------------------------------- module wrapper -------------------------------
class DFTFunc:
    def __init__(self, n_fft=2048, freq_bins=None, fmin=50, fmax=6000,
                 sr=22050, trainable=False, output_format="Complex"):
        self.output_format = output_format
        self.trainable = trainable
        self.n_fft = n_fft
        wsin, wcos = create_dft_kernels(n_fft, freq_bins=freq_bins,
                                        fmin=fmin, fmax=fmax, sr=sr)
        F = wsin.shape[0]
        self.freq_bins = F

        # Frequency tile: 256 fills the 2x256^2 MXU on v6e/v7x; fall back to
        # 128 when freq_bins doesn't allow it or the weight tile would bloat
        # VMEM for very large n_fft (v7x has only 64 MiB VMEM per TC).
        F_pad128 = _round_up(F, 128)
        self.tf = 256 if (F_pad128 % 256 == 0 and n_fft <= 4096) else 128
        F_pad = _round_up(F, self.tf)

        # Stacked, pre-transposed, zero-padded weights: (2, n_fft, F_pad).
        # w[0] = -wsin^T  (kernel output is then -spec_imag directly, so the
        #                  Complex path needs no extra negation pass),
        # w[1] =  wcos^T.  Kept f32 to match PyTorch numerics.
        # TODO(synk): optionally store in bf16 for ~2x less weight traffic.
        w = np.zeros((2, n_fft, F_pad), dtype=np.float32)
        w[0, :, :F] = -wsin.T
        w[1, :, :F] = wcos.T
        self.w = jnp.asarray(w)

    def __call__(self, x, output_format=None):
        fmt = output_format or self.output_format
        xb = broadcast_dim(jnp.asarray(x, dtype=jnp.float32))
        lead = xb.shape[:-1]
        x2d = xb.reshape((-1, xb.shape[-1]))
        M = x2d.shape[0]
        F = self.freq_bins

        # M tile: multiple of 8, capped so double-buffered x/out tiles stay
        # bounded in VMEM on all generations.
        tm_cap = 256 if self.n_fft <= 4096 else 128
        tm = min(tm_cap, _round_up(M, 8))

        outs = dft_pallas(x2d, self.w, fmt=fmt, trainable=self.trainable,
                          tm=tm, tf=self.tf)

        if fmt == "Complex":
            neg_imag, real = outs
            neg_imag = neg_imag[:, :F].reshape(lead + (F,))
            real = real[:, :F].reshape(lead + (F,))
            # torch.view_as_complex(stack((real, -imag), -1)).squeeze()
            return jnp.squeeze(jax.lax.complex(real, neg_imag))
        elif fmt in ("Magnitude", "Phase"):
            return outs[0][:, :F].reshape(lead + (F,))
        else:
            raise ValueError(f"unknown output_format {fmt}")


# ----------------------------------- main -------------------------------------
if __name__ == "__main__":
    key = jax.random.PRNGKey(0)

    # Case 1: (batch, channel, n_fft) input, Complex output.
    # n_fft=256 -> freq_bins=(256-1)//2+1 = 128.
    n_fft = 256
    batch, channels = 2, 4
    module = DFTFunc(n_fft=n_fft, freq_bins=None, fmin=50, fmax=6000,
                     sr=22050, trainable=False, output_format="Complex")
    x = jax.random.normal(key, (batch, channels, n_fft), dtype=jnp.float32)
    out = jax.block_until_ready(module(x))                     # complex64 (2,4,128)

    wsin, wcos = create_dft_kernels(n_fft, sr=22050)
    xb = broadcast_dim(x)
    ref_imag = jnp.matmul(xb, jnp.asarray(wsin.T))
    ref_real = jnp.matmul(xb, jnp.asarray(wcos.T))
    ref = jnp.squeeze(jax.lax.complex(ref_real, -ref_imag))
    assert out.shape == ref.shape and out.dtype == ref.dtype
    np.testing.assert_allclose(np.asarray(out), np.asarray(ref), rtol=1e-4, atol=1e-3)

    # Case 2: 2-D input, non-multiple-of-128 freq_bins, fused Magnitude/Phase.
    module2 = DFTFunc(n_fft=512, freq_bins=200, fmin=50, fmax=6000,
                      sr=22050, trainable=False, output_format="Magnitude")
    x2 = jax.random.normal(jax.random.PRNGKey(1), (3, 512), dtype=jnp.float32)
    mag = jax.block_until_ready(module2(x2))
    phase = jax.block_until_ready(module2(x2, output_format="Phase"))

    wsin2, wcos2 = create_dft_kernels(512, freq_bins=200, sr=22050)
    xb2 = broadcast_dim(x2)
    ri = jnp.matmul(xb2, jnp.asarray(wsin2.T))
    rr = jnp.matmul(xb2, jnp.asarray(wcos2.T))
    ref_mag = jnp.sqrt(rr ** 2 + ri ** 2)
    ref_phase = jnp.arctan2(-ri + 0.0, rr)
    np.testing.assert_allclose(np.asarray(mag), np.asarray(ref_mag),
                               rtol=1e-4, atol=1e-3)
    np.testing.assert_allclose(np.asarray(phase), np.asarray(ref_phase),
                               rtol=1e-4, atol=1e-3)

    print("KERNEL_OK")
</pallas_src>

<mosaic_0001>
module attributes {stable_mosaic.version = 11 : i64} {
  func.func @kernel(%arg0: i32, %arg1: i32, %arg2: memref<8x256xf32, #tpu.memory_space<vmem>>, %arg3: memref<2x256x128xf32, #tpu.memory_space<vmem>>, %arg4: memref<8x128xf32, #tpu.memory_space<vmem>>, %arg5: memref<8x128xf32, #tpu.memory_space<vmem>>) attributes {dimension_semantics = [#tpu.dimension_semantics<parallel>, #tpu.dimension_semantics<parallel>], iteration_bounds = array<i64: 1, 1>, scalar_prefetch = 0 : i64, scratch_operands = 0 : i64, tpu.core_type = #tpu.core_type<tc>, window_params = [{transform_indices = @transform_0, window_bounds = array<i64: 8, 256>}, {transform_indices = @transform_1, window_bounds = array<i64: 2, 256, 128>}, {transform_indices = @transform_2, window_bounds = array<i64: 8, 128>}, {transform_indices = @transform_3, window_bounds = array<i64: 8, 128>}]} {
    %c0 = arith.constant 0 : index
    %c0_0 = arith.constant 0 : index
    %0 = vector.load %arg2[%c0, %c0_0] : memref<8x256xf32, #tpu.memory_space<vmem>>, vector<8x256xf32>
    %c0_1 = arith.constant 0 : index
    %c0_2 = arith.constant 0 : index
    %c0_3 = arith.constant 0 : index
    %1 = vector.load %arg3[%c0_1, %c0_2, %c0_3] : memref<2x256x128xf32, #tpu.memory_space<vmem>>, vector<1x256x128xf32>
    %2 = vector.shape_cast %1 : vector<1x256x128xf32> to vector<256x128xf32>
    %cst = arith.constant dense<0.000000e+00> : vector<8x128xf32>
    %3 = tpu.matmul %0, %2, %cst {dimension_numbers = #tpu.dot_dimension_numbers<[1], [0], [0], [1], [0, 0, 1, 1], [], []>} : vector<8x256xf32>, vector<256x128xf32>, vector<8x128xf32> -> vector<8x128xf32>
    %c0_4 = arith.constant 0 : index
    %c0_5 = arith.constant 0 : index
    %4 = vector.load %arg4[%c0_4, %c0_5] : memref<8x128xf32, #tpu.memory_space<vmem>>, vector<8x128xf32>
    tpu.vector_store %arg4[%c0_4, %c0_5], %3 {strides = array<i32>} : memref<8x128xf32, #tpu.memory_space<vmem>>, vector<8x128xf32>,
    %c1 = arith.constant 1 : index
    %c0_6 = arith.constant 0 : index
    %c0_7 = arith.constant 0 : index
    %5 = vector.load %arg3[%c1, %c0_6, %c0_7] : memref<2x256x128xf32, #tpu.memory_space<vmem>>, vector<1x256x128xf32>
    %6 = vector.shape_cast %5 : vector<1x256x128xf32> to vector<256x128xf32>
    %cst_8 = arith.constant dense<0.000000e+00> : vector<8x128xf32>
    %7 = tpu.matmul %0, %6, %cst_8 {dimension_numbers = #tpu.dot_dimension_numbers<[1], [0], [0], [1], [0, 0, 1, 1], [], []>} : vector<8x256xf32>, vector<256x128xf32>, vector<8x128xf32> -> vector<8x128xf32>
    %c0_9 = arith.constant 0 : index
    %c0_10 = arith.constant 0 : index
    %8 = vector.load %arg5[%c0_9, %c0_10] : memref<8x128xf32, #tpu.memory_space<vmem>>, vector<8x128xf32>
    tpu.vector_store %arg5[%c0_9, %c0_10], %7 {strides = array<i32>} : memref<8x128xf32, #tpu.memory_space<vmem>>, vector<8x128xf32>,
    return
  }
  func.func @transform_0(%arg0: i32, %arg1: i32) -> (i32, i32) {
    %c0_i32 = arith.constant 0 : i32
    %c0_i32_0 = arith.constant 0 : i32
    return %arg0, %c0_i32 : i32, i32
  }
  func.func @transform_1(%arg0: i32, %arg1: i32) -> (i32, i32, i32) {
    %c0_i32 = arith.constant 0 : i32
    %c0_i32_0 = arith.constant 0 : i32
    %c0_i32_1 = arith.constant 0 : i32
    return %c0_i32, %c0_i32_0, %arg1 : i32, i32, i32
  }
  func.func @transform_2(%arg0: i32, %arg1: i32) -> (i32, i32) {
    %c0_i32 = arith.constant 0 : i32
    return %arg0, %arg1 : i32, i32
  }
  func.func @transform_3(%arg0: i32, %arg1: i32) -> (i32, i32) {
    %c0_i32 = arith.constant 0 : i32
    return %arg0, %arg1 : i32, i32
  }
}

</mosaic_0001>

<llo_original>
// kernel: dft_pallas.1
$region0: #{dft_pallas.1}
  #allocation0 [shape = 'u32[]', space=smem, size = 0x4, offset = 0x4, fixed_abs, tag = 'smem constant byte address 0x4 - core index']
  #allocation1 [shape = 'u32[72,128]{1,0:T(1,128)}', space=vmem, size = 0x9000, scoped, tag = 'internal scratch']
  %s0 = inlined_call_operand.hbm [shape: f32[8,256], index: 0, kind: input, shape index: {}]
  %s1 = inlined_call_operand.hbm [shape: f32[2,256,128], index: 1, kind: input, shape index: {}]
  %s2 = inlined_call_operand.hbm [shape: f32[8,128], index: 2, kind: output, shape index: {0}]
  %s3 = inlined_call_operand.hbm [shape: f32[8,128], index: 3, kind: output, shape index: {1}]
  %4 = xla_tuple %s2, %s3
  %s5 = sld [smem:[#allocation0]]
  $region34: #{dft_pallas.1} parent=0
    _
  %s7 = ssub.s32 1, %s5
  %s8 = scalar_select 0, %s7, %s5
  $region1: #{dft_pallas.1} parent=0
    #allocation2 [shape = 'u8[8192]{0}', space=vmem, size = 0x2000, scoped, tag = 'input window, operand 0, single buffered']
    #allocation3 [shape = 's32[1]{0}', space=sflag, size = 0x4, scoped, tag = 'scoped memory for dft_pallas.1']
    #allocation4 [shape = 's32[1]{0}', space=sflag, size = 0x4, scoped, tag = 'scoped memory for dft_pallas.1']
    #allocation5 [shape = 'u8[262144]{0}', space=vmem, size = 0x40000, scoped, tag = 'input window, operand 1, single buffered']
    #allocation6 [shape = 's32[1]{0}', space=sflag, size = 0x4, scoped, tag = 'scoped memory for dft_pallas.1']
    #allocation7 [shape = 'u8[4096]{0}', space=vmem, size = 0x1000, scoped, tag = 'output window, operand 0, single buffered']
    #allocation8 [shape = 'u8[4096]{0}', space=vmem, size = 0x1000, scoped, tag = 'output window, operand 1, single buffered']
    #allocation9 [shape = 's32[1]{0}', space=sflag, size = 0x4, scoped, tag = 'scoped memory for dft_pallas.1']
    %9 = vsyncpa [#allocation3], 0
    %10 = vsyncpa [#allocation6], 0
    %11 = vsyncpa [#allocation4], 0
    %12 = vsyncpa [#allocation9], 0
    // Predicated region
    $region2: #{dft_pallas.1} parent=1 // pred_check
      _
    $region3: #{dft_pallas.1} parent=1 // pred_check_branch
      %14 = sbr.rel (0) target = $region5
    $region4: #{dft_pallas.1} parent=1 // pred_region
      %16 = vsyncadd [#allocation3], 0
      %s18 = sshll.u32 %s0, 4
      %s19 = int_to_ptr.hbm [resolvable:$true] %s18
      %s20 = sshll.u32 [#allocation2], 4
      %s21 = int_to_ptr.vmem [resolvable:$true] %s20
      %23 = dma.hbm_to_vmem [thread:$0]  %s19, 256, %s21, [#allocation3]
    $region5: #{dft_pallas.1} parent=1 // pred_fallthru
      _
    // Predicated region
    $region6: #{dft_pallas.1} parent=1 // pred_check
      _
    $region7: #{dft_pallas.1} parent=1 // pred_check_branch
      %25 = sbr.rel (0) target = $region9
    $region8: #{dft_pallas.1} parent=1 // pred_region
      %27 = vsyncadd [#allocation6], 0
      %s28 = sshll.u32 %s1, 4
      %s29 = int_to_ptr.hbm [resolvable:$true] %s28
      %s30 = sshll.u32 [#allocation5], 4
      %s31 = int_to_ptr.vmem [resolvable:$true] %s30
      %36 = dma.hbm_to_vmem [thread:$0]  %s29, 8192, %s31, [#allocation6], 128, 128, 8
    $region9: #{dft_pallas.1} parent=1 // pred_fallthru
      _
    // Predicated region
    $region10: #{dft_pallas.1} parent=1 // pred_check
      _
    $region11: #{dft_pallas.1} parent=1 // pred_check_branch
      %38 = sbr.rel (0) target = $region13
    $region12: #{dft_pallas.1} parent=1 // pred_region
      %40 = dma.done [#allocation3], 256
    $region13: #{dft_pallas.1} parent=1 // pred_fallthru
      _
    // Predicated region
    $region14: #{dft_pallas.1} parent=1 // pred_check
      _
    $region15: #{dft_pallas.1} parent=1 // pred_check_branch
      %42 = sbr.rel (0) target = $region17
    $region16: #{dft_pallas.1} parent=1 // pred_region
      %44 = dma.done [#allocation6], 8192
    $region17: #{dft_pallas.1} parent=1 // pred_fallthru
      _
    %v45 = vld [vmem:[#allocation2] sm:$0xff]
    %v46 = vld [vmem:[#allocation2 + $0x8] sm:$0xff]
    %v47 = vld [vmem:[#allocation5] sm:$0xff]
    %v48 = vld [vmem:[#allocation5 + $0x8] sm:$0xff]
    %v49 = vld [vmem:[#allocation5 + $0x10] sm:$0xff]
    %v50 = vld [vmem:[#allocation5 + $0x18] sm:$0xff]
    %v51 = vld [vmem:[#allocation5 + $0x20] sm:$0xff]
    %v52 = vld [vmem:[#allocation5 + $0x28] sm:$0xff]
    %v53 = vld [vmem:[#allocation5 + $0x30] sm:$0xff]
    %v54 = vld [vmem:[#allocation5 + $0x38] sm:$0xff]
    %v55 = vld [vmem:[#allocation5 + $0x40] sm:$0xff]
    %v56 = vld [vmem:[#allocation5 + $0x48] sm:$0xff]
    %v57 = vld [vmem:[#allocation5 + $0x50] sm:$0xff]
    %v58 = vld [vmem:[#allocation5 + $0x58] sm:$0xff]
    %v59 = vld [vmem:[#allocation5 + $0x60] sm:$0xff]
    %v60 = vld [vmem:[#allocation5 + $0x68] sm:$0xff]
    %v61 = vld [vmem:[#allocation5 + $0x70] sm:$0xff]
    %v62 = vld [vmem:[#allocation5 + $0x78] sm:$0xff]
    %v63 = vld [vmem:[#allocation5 + $0x80] sm:$0xff]
    %v64 = vld [vmem:[#allocation5 + $0x88] sm:$0xff]
    %v65 = vld [vmem:[#allocation5 + $0x90] sm:$0xff]
    %v66 = vld [vmem:[#allocation5 + $0x98] sm:$0xff]
    %v67 = vld [vmem:[#allocation5 + $0xa0] sm:$0xff]
    %v68 = vld [vmem:[#allocation5 + $0xa8] sm:$0xff]
    %v69 = vld [vmem:[#allocation5 + $0xb0] sm:$0xff]
    %v70 = vld [vmem:[#allocation5 + $0xb8] sm:$0xff]
    %v71 = vld [vmem:[#allocation5 + $0xc0] sm:$0xff]
    %v72 = vld [vmem:[#allocation5 + $0xc8] sm:$0xff]
    %v73 = vld [vmem:[#allocation5 + $0xd0] sm:$0xff]
    %v74 = vld [vmem:[#allocation5 + $0xd8] sm:$0xff]
    %v75 = vld [vmem:[#allocation5 + $0xe0] sm:$0xff]
    %v76 = vld [vmem:[#allocation5 + $0xe8] sm:$0xff]
    %v77 = vld [vmem:[#allocation5 + $0xf0] sm:$0xff]
    %v78 = vld [vmem:[#allocation5 + $0xf8] sm:$0xff]
    %79 = vmatpush.msra.mxu0 %v62
    %80 = vmatpush.msra.mxu0 %v61
    %81 = vmatpush.msra.mxu0 %v60
    %82 = vmatpush.msra.mxu0 %v59
    %83 = vmatpush.msra.mxu0 %v58
    %84 = vmatpush.msra.mxu0 %v57
    %85 = vmatpush.msra.mxu0 %v56
    %86 = vmatpush.msra.mxu0 %v55
    %87 = vmatpush.msra.mxu0 %v54
    %88 = vmatpush.msra.mxu0 %v53
    %89 = vmatpush.msra.mxu0 %v52
    %90 = vmatpush.msra.mxu0 %v51
    %91 = vmatpush.msra.mxu0 %v50
    %92 = vmatpush.msra.mxu0 %v49
    %93 = vmatpush.msra.mxu0 %v48
    %94 = vmatpush.msra.mxu0 %v47
    %95 = vmatmul.f32.gmra.mxu0 %v45
    %v96 = vpop.f32.mrf.mxu0
    %v97 = vadd.f32 0.0, %v96
    %98 = vdwg.mxu0
    %99 = vmatpush.msra.mxu0 %v78
    %100 = vmatpush.msra.mxu0 %v77
    %101 = vmatpush.msra.mxu0 %v76
    %102 = vmatpush.msra.mxu0 %v75
    %103 = vmatpush.msra.mxu0 %v74
    %104 = vmatpush.msra.mxu0 %v73
    %105 = vmatpush.msra.mxu0 %v72
    %106 = vmatpush.msra.mxu0 %v71
    %107 = vmatpush.msra.mxu0 %v70
    %108 = vmatpush.msra.mxu0 %v69
    %109 = vmatpush.msra.mxu0 %v68
    %110 = vmatpush.msra.mxu0 %v67
    %111 = vmatpush.msra.mxu0 %v66
    %112 = vmatpush.msra.mxu0 %v65
    %113 = vmatpush.msra.mxu0 %v64
    %114 = vmatpush.msra.mxu0 %v63
    %115 = vmatmul.f32.gmra.mxu0 %v46
    %v116 = vpop.f32.mrf.mxu0
    %v117 = vadd.f32 %v97, %v116
    %118 = vdwg.mxu0
    %119 = vst [vmem:[#allocation7] sm:$0xff] %v117
    %s120 = scalar_lea.vmem [#allocation5], 256
    %v121 = vld [vmem:[%s120] sm:$0xff]
    %v122 = vld [vmem:[%s120 + $0x8] sm:$0xff]
    %v123 = vld [vmem:[%s120 + $0x10] sm:$0xff]
    %v124 = vld [vmem:[%s120 + $0x18] sm:$0xff]
    %v125 = vld [vmem:[%s120 + $0x20] sm:$0xff]
    %v126 = vld [vmem:[%s120 + $0x28] sm:$0xff]
    %v127 = vld [vmem:[%s120 + $0x30] sm:$0xff]
    %v128 = vld [vmem:[%s120 + $0x38] sm:$0xff]
    %v129 = vld [vmem:[%s120 + $0x40] sm:$0xff]
    %v130 = vld [vmem:[%s120 + $0x48] sm:$0xff]
    %v131 = vld [vmem:[%s120 + $0x50] sm:$0xff]
    %v132 = vld [vmem:[%s120 + $0x58] sm:$0xff]
    %v133 = vld [vmem:[%s120 + $0x60] sm:$0xff]
    %v134 = vld [vmem:[%s120 + $0x68] sm:$0xff]
    %v135 = vld [vmem:[%s120 + $0x70] sm:$0xff]
    %v136 = vld [vmem:[%s120 + $0x78] sm:$0xff]
    %v137 = vld [vmem:[%s120 + $0x80] sm:$0xff]
    %v138 = vld [vmem:[%s120 + $0x88] sm:$0xff]
    %v139 = vld [vmem:[%s120 + $0x90] sm:$0xff]
    %v140 = vld [vmem:[%s120 + $0x98] sm:$0xff]
    %v141 = vld [vmem:[%s120 + $0xa0] sm:$0xff]
    %v142 = vld [vmem:[%s120 + $0xa8] sm:$0xff]
    %v143 = vld [vmem:[%s120 + $0xb0] sm:$0xff]
    %v144 = vld [vmem:[%s120 + $0xb8] sm:$0xff]
    %v145 = vld [vmem:[%s120 + $0xc0] sm:$0xff]
    %v146 = vld [vmem:[%s120 + $0xc8] sm:$0xff]
    %v147 = vld [vmem:[%s120 + $0xd0] sm:$0xff]
    %v148 = vld [vmem:[%s120 + $0xd8] sm:$0xff]
    %v149 = vld [vmem:[%s120 + $0xe0] sm:$0xff]
    %v150 = vld [vmem:[%s120 + $0xe8] sm:$0xff]
    %v151 = vld [vmem:[%s120 + $0xf0] sm:$0xff]
    %v152 = vld [vmem:[%s120 + $0xf8] sm:$0xff]
    %153 = vmatpush.msra.mxu0 %v136
    %154 = vmatpush.msra.mxu0 %v135
    %155 = vmatpush.msra.mxu0 %v134
    %156 = vmatpush.msra.mxu0 %v133
    %157 = vmatpush.msra.mxu0 %v132
    %158 = vmatpush.msra.mxu0 %v131
    %159 = vmatpush.msra.mxu0 %v130
    %160 = vmatpush.msra.mxu0 %v129
    %161 = vmatpush.msra.mxu0 %v128
    %162 = vmatpush.msra.mxu0 %v127
    %163 = vmatpush.msra.mxu0 %v126
    %164 = vmatpush.msra.mxu0 %v125
    %165 = vmatpush.msra.mxu0 %v124
    %166 = vmatpush.msra.mxu0 %v123
    %167 = vmatpush.msra.mxu0 %v122
    %168 = vmatpush.msra.mxu0 %v121
    %169 = vmatmul.f32.gmra.mxu0 %v45
    %v170 = vpop.f32.mrf.mxu0
    %v171 = vadd.f32 0.0, %v170
    %172 = vdwg.mxu0
    %173 = vmatpush.msra.mxu0 %v152
    %174 = vmatpush.msra.mxu0 %v151
    %175 = vmatpush.msra.mxu0 %v150
    %176 = vmatpush.msra.mxu0 %v149
    %177 = vmatpush.msra.mxu0 %v148
    %178 = vmatpush.msra.mxu0 %v147
    %179 = vmatpush.msra.mxu0 %v146
    %180 = vmatpush.msra.mxu0 %v145
    %181 = vmatpush.msra.mxu0 %v144
    %182 = vmatpush.msra.mxu0 %v143
    %183 = vmatpush.msra.mxu0 %v142
    %184 = vmatpush.msra.mxu0 %v141
    %185 = vmatpush.msra.mxu0 %v140
    %186 = vmatpush.msra.mxu0 %v139
    %187 = vmatpush.msra.mxu0 %v138
    %188 = vmatpush.msra.mxu0 %v137
    %189 = vmatmul.f32.gmra.mxu0 %v46
    %v190 = vpop.f32.mrf.mxu0
    %v191 = vadd.f32 %v171, %v190
    %192 = vdwg.mxu0
    %193 = vst [vmem:[#allocation8] sm:$0xff] %v191
    // Predicated region
    $region18: #{dft_pallas.1} parent=1 // pred_check
      _
    $region19: #{dft_pallas.1} parent=1 // pred_check_branch
      %195 = sbr.rel (0) target = $region21
    $region20: #{dft_pallas.1} parent=1 // pred_region
      %197 = vsyncadd [#allocation4], 0
      %s199 = sshll.u32 [#allocation7], 4
      %s200 = int_to_ptr.vmem [resolvable:$true] %s199
      %s201 = sshll.u32 %s2, 4
      %s202 = int_to_ptr.hbm [resolvable:$true] %s201
      %204 = dma.vmem_to_hbm [thread:$0]  %s200, 128, %s202, [#allocation4]
    $region21: #{dft_pallas.1} parent=1 // pred_fallthru
      _
    // Predicated region
    $region22: #{dft_pallas.1} parent=1 // pred_check
      _
    $region23: #{dft_pallas.1} parent=1 // pred_check_branch
      %206 = sbr.rel (0) target = $region25
    $region24: #{dft_pallas.1} parent=1 // pred_region
      %208 = vsyncadd [#allocation9], 0
      %s210 = sshll.u32 [#allocation8], 4
      %s211 = int_to_ptr.vmem [resolvable:$true] %s210
      %s212 = sshll.u32 %s3, 4
      %s213 = int_to_ptr.hbm [resolvable:$true] %s212
      %215 = dma.vmem_to_hbm [thread:$0]  %s211, 128, %s213, [#allocation9]
    $region25: #{dft_pallas.1} parent=1 // pred_fallthru
      _
    // Predicated region
    $region26: #{dft_pallas.1} parent=1 // pred_check
      _
    $region27: #{dft_pallas.1} parent=1 // pred_check_branch
      %217 = sbr.rel (0) target = $region29
    $region28: #{dft_pallas.1} parent=1 // pred_region
      %219 = dma.done [#allocation4], 128
    $region29: #{dft_pallas.1} parent=1 // pred_fallthru
      _
    // Predicated region
    $region30: #{dft_pallas.1} parent=1 // pred_check
      _
    $region31: #{dft_pallas.1} parent=1 // pred_check_branch
      %221 = sbr.rel (0) target = $region33
    $region32: #{dft_pallas.1} parent=1 // pred_region
      %223 = dma.done [#allocation9], 128
    $region33: #{dft_pallas.1} parent=1 // pred_fallthru
      _
    %224 = vsyncpa [#allocation3], 1
    %225 = vsyncpa [#allocation6], 1
    %226 = vsyncpa [#allocation4], 1
    %227 = vsyncpa [#allocation9], 1

</llo_original>
